<compile_context>
chip_gen: v5e
topology: v5e:2x2
jax: 0.10.0
libtpu: 0.0.40
codegen_flags: <defaults>
</compile_context>

<pallas_src>
import jax
import jax.numpy as jnp
from jax.experimental import pallas as pl
from jax.experimental.pallas import tpu as pltpu

VOCAB = 38
DIM = 2048
DEFAULT_BLOCK_N = 1024            # 1024*2048*4B = 8 MiB output block
VMEM_LIMIT_BYTES = 32 * 1024 * 1024


def _embed_gather_kernel(idx_ref, table_ref, out_ref):
    # idx_ref   : VMEM int32 [block_n, 1]   (token ids for this block)
    # table_ref : VMEM f32   [VOCAB, DIM]   (whole table, resident)
    # out_ref   : VMEM f32   [block_n, DIM]
    #
    # Clamp in-kernel: with no host-side padding, the ragged last block's
    # out-of-range rows contain arbitrary values.  VPU is idle, so this is free.
    idx = jnp.clip(idx_ref[...], 0, VOCAB - 1)                      # (block_n, 1)
    iota = jax.lax.broadcasted_iota(jnp.int32, (idx.shape[0], VOCAB), 1)
    onehot = (idx == iota).astype(table_ref.dtype)                  # (block_n, VOCAB)
    # One-hot gather on the MXU; store path is the intended critical resource.
    out_ref[...] = jnp.dot(
        onehot, table_ref[...], preferred_element_type=jnp.float32
    ).astype(out_ref.dtype)


def sig_embedding(signal: jax.Array, table: jax.Array) -> jax.Array:
    """Embedding lookup: returns table[signal] with shape signal.shape + (DIM,)."""
    orig_shape = signal.shape
    idx = signal.reshape(-1, 1).astype(jnp.int32)
    n = idx.shape[0]

    # Token-axis block: multiple of 8 (sublane-dense stores), and at most
    # ~half of n so there are >= 2 blocks for the parallel axis on v7x.
    block_n = min(DEFAULT_BLOCK_N, max(8, (((n + 1) // 2) + 7) // 8 * 8))
    num_blocks = pl.cdiv(n, block_n)          # ragged tail handled by Pallas

    grid_spec = pltpu.PrefetchScalarGridSpec(
        num_scalar_prefetch=0,
        grid=(num_blocks,),
        in_specs=[
            # Per-block token ids.
            pl.BlockSpec((block_n, 1), lambda b: (b, 0)),
            # Entire table, VMEM-resident across all grid steps (constant map).
            pl.BlockSpec((VOCAB, DIM), lambda b: (0, 0)),
        ],
        out_specs=pl.BlockSpec((block_n, DIM), lambda b: (b, 0)),
    )

    itemsize = jnp.dtype(table.dtype).itemsize
    cost = pl.CostEstimate(
        flops=2 * n * VOCAB * DIM,
        transcendentals=0,
        bytes_accessed=n * DIM * itemsize + VOCAB * DIM * itemsize + n * 4,
    )

    out = pl.pallas_call(
        _embed_gather_kernel,
        out_shape=jax.ShapeDtypeStruct((n, DIM), table.dtype),
        grid_spec=grid_spec,
        compiler_params=pltpu.CompilerParams(
            dimension_semantics=("parallel",),
            vmem_limit_bytes=VMEM_LIMIT_BYTES,
        ),
        cost_estimate=cost,
    )(idx, table)

    return out.reshape(*orig_shape, DIM)


if __name__ == "__main__":
    key = jax.random.PRNGKey(0)
    k_table, k_idx = jax.random.split(key)

    # Deterministic parameter init (nn.Embedding default: N(0, 1)).
    table = jax.random.normal(k_table, (VOCAB, DIM), dtype=jnp.float32)

    # Small example input: batch=2, seq=8 integer signal ids in [0, 38).
    signal = jax.random.randint(k_idx, (2, 8), 0, VOCAB, dtype=jnp.int32)
    out = jax.block_until_ready(sig_embedding(signal, table))
    ref = table[signal]
    assert out.shape == (2, 8, DIM), out.shape
    assert jnp.allclose(out, ref), "mismatch vs reference gather"

    # Ragged-tail case (n = 21, not a multiple of the block size) to exercise
    # the no-padding boundary path.
    signal2 = jax.random.randint(jax.random.PRNGKey(1), (3, 7), 0, VOCAB,
                                 dtype=jnp.int32)
    out2 = jax.block_until_ready(sig_embedding(signal2, table))
    assert out2.shape == (3, 7, DIM), out2.shape
    assert jnp.allclose(out2, table[signal2]), "mismatch on ragged input"

    print("KERNEL_OK")
</pallas_src>

<mosaic_0001>
module attributes {stable_mosaic.version = 11 : i64} {
  func.func @_embed_gather_kernel(%arg0: i32, %arg1: memref<8x1xi32, #tpu.memory_space<vmem>>, %arg2: memref<38x2048xf32, #tpu.memory_space<vmem>>, %arg3: memref<8x2048xf32, #tpu.memory_space<vmem>>) attributes {dimension_semantics = [#tpu.dimension_semantics<parallel>], iteration_bounds = array<i64: 2>, scalar_prefetch = 0 : i64, scratch_operands = 0 : i64, tpu.core_type = #tpu.core_type<tc>, window_params = [{transform_indices = @transform_0, window_bounds = array<i64: 8, 1>}, {pipeline_mode = #tpu.pipeline_mode<synchronous>, transform_indices = @transform_1, window_bounds = array<i64: 38, 2048>}, {transform_indices = @transform_2, window_bounds = array<i64: 8, 2048>}]} {
    %c0 = arith.constant 0 : index
    %c0_0 = arith.constant 0 : index
    %0 = vector.load %arg1[%c0, %c0_0] : memref<8x1xi32, #tpu.memory_space<vmem>>, vector<8x1xi32>
    %c0_i32 = arith.constant 0 : i32
    %c37_i32 = arith.constant 37 : i32
    %1 = vector.broadcast %c0_i32 : i32 to vector<8x1xi32>
    %2 = arith.maxsi %1, %0 : vector<8x1xi32>
    %3 = vector.broadcast %c37_i32 : i32 to vector<8x1xi32>
    %4 = arith.minsi %3, %2 : vector<8x1xi32>
    %5 = tpu.iota {dimensions = array<i32: 1>} : vector<8x38xi32>
    %6 = vector.broadcast %4 : vector<8x1xi32> to vector<8x38xi32>
    %7 = arith.cmpi eq, %6, %5 : vector<8x38xi32>
    %8 = arith.extui %7 : vector<8x38xi1> to vector<8x38xi32>
    %9 = arith.sitofp %8 : vector<8x38xi32> to vector<8x38xf32>
    %c0_1 = arith.constant 0 : index
    %c0_2 = arith.constant 0 : index
    %10 = vector.load %arg2[%c0_1, %c0_2] : memref<38x2048xf32, #tpu.memory_space<vmem>>, vector<38x2048xf32>
    %cst = arith.constant dense<0.000000e+00> : vector<8x2048xf32>
    %11 = tpu.matmul %9, %10, %cst {dimension_numbers = #tpu.dot_dimension_numbers<[1], [0], [0], [1], [0, 0, 1, 1], [], []>} : vector<8x38xf32>, vector<38x2048xf32>, vector<8x2048xf32> -> vector<8x2048xf32>
    %c0_3 = arith.constant 0 : index
    %c0_4 = arith.constant 0 : index
    %12 = vector.load %arg3[%c0_3, %c0_4] : memref<8x2048xf32, #tpu.memory_space<vmem>>, vector<8x2048xf32>
    tpu.vector_store %arg3[%c0_3, %c0_4], %11 {strides = array<i32>} : memref<8x2048xf32, #tpu.memory_space<vmem>>, vector<8x2048xf32>,
    return
  }
  func.func @transform_0(%arg0: i32) -> (i32, i32) {
    %c0_i32 = arith.constant 0 : i32
    %c0_i32_0 = arith.constant 0 : i32
    return %arg0, %c0_i32 : i32, i32
  }
  func.func @transform_1(%arg0: i32) -> (i32, i32) {
    %c0_i32 = arith.constant 0 : i32
    %c0_i32_0 = arith.constant 0 : i32
    %c0_i32_1 = arith.constant 0 : i32
    return %c0_i32, %c0_i32_0 : i32, i32
  }
  func.func @transform_2(%arg0: i32) -> (i32, i32) {
    %c0_i32 = arith.constant 0 : i32
    %c0_i32_0 = arith.constant 0 : i32
    return %arg0, %c0_i32 : i32, i32
  }
}

</mosaic_0001>

<llo_original>
// kernel: tpu_custom_call.1
$region0: #{tpu_custom_call.1}
  #allocation0 [shape = 'u32[]', space=smem, size = 0x4, offset = 0x4, fixed_abs, tag = 'smem constant byte address 0x4 - core index']
  #allocation1 [shape = 'u32[72,128]{1,0:T(1,128)}', space=vmem, size = 0x9000, scoped, tag = 'internal scratch']
  %s0 = inlined_call_operand.vmem [shape: s32[16,1], index: 0, kind: input, shape index: {}]
  %s1 = inlined_call_operand.hbm [shape: f32[38,2048], index: 1, kind: input, shape index: {}]
  %s2 = inlined_call_operand.hbm [shape: f32[16,2048], index: 2, kind: output, shape index: {}]
  %s3 = sld [smem:[#allocation0]]
  $region45: #{tpu_custom_call.1} parent=0
    _
  %s5 = ssub.s32 1, %s3
  %s6 = scalar_select 0, %s5, %s3
  $region1: #{tpu_custom_call.1} parent=0
    #allocation2 [shape = 'u8[327680]{0}', space=vmem, size = 0x50000, scoped, tag = 'input window, operand 1, single buffered']
    #allocation3 [shape = 's32[2]{0}', space=sflag, size = 0x8, scoped, tag = 'scoped memory for tpu_custom_call.1']
    #allocation4 [shape = 's32[2]{0}', space=sflag, size = 0x8, scoped, tag = 'scoped memory for tpu_custom_call.1']
    #allocation5 [shape = 'u8[131072]{0}', space=vmem, size = 0x20000, scoped, tag = 'output window, operand 0']
    %7 = vsyncpa [#allocation3], 0
    %8 = vsyncpa [#allocation4], 0
    %s9 = scalar_lea.sflag [#allocation4], 1
    %10 = vsyncpa %s9, 0
    loop: start=0, step=1, limit=4
    $region2: #{tpu_custom_call.1} parent=1 // loop_pre_header
      _
    $region3: #{tpu_custom_call.1} parent=1 // loop_header
      %s12 = sphi 0, %s16
      %p13 = scmp.ge.s32.totalorder %s12, 4
      %s22 = sphi 0, %s24
      %s25 = sphi 0, %s22
      %s26 = sphi 0, %s25
      %s42 = sphi 0, %s26
      %s46 = sphi 0, %s46
      %s48 = sphi 0, %s46
      %s49 = sphi 0, %s48
      %s63 = sphi 0, %s49
      %s69 = sphi 0, %s71
      %s72 = sphi 0, %s69
      %s73 = sphi 0, %s72
      %s89 = sphi 0, %s73
    $region4: #{tpu_custom_call.1} parent=1 // loop_header_branch
      %15 = sbr.rel (%p13) target = $region8
    $region5: #{tpu_custom_call.1} parent=1 // loop_body
      %s17 = ssub.s32 %s12, 1
      %s18 = ssub.s32 %s12, 2
      %s19 = sadd.s32 %s12, 1
      %s20 = ssub.s32 %s12, %s19
      %p21 = scmp.eq.s32.totalorder %s20, 0
      %s23 = sadd.s32 %s22, 1
      %s24 = scalar_select %p21, %s22, %s23
      %p27 = pneg %p21
      %p28 = scmp.eq.s32.totalorder %s12, 1
      %p29 = por %p27, %p28
      %p30 = scmp.ne.s32.totalorder %s22, %s25
      %p31 = scmp.eq.s32.totalorder %s12, 0
      %p32 = por %p30, %p31
      %p33 = scmp.ne.s32.totalorder %s22, %s25
      %p34 = scmp.eq.s32.totalorder %s17, 1
      %p35 = por %p33, %p34
      %p36 = scmp.ne.s32.totalorder %s25, %s26
      %p37 = scmp.eq.s32.totalorder %s17, 0
      %p38 = por %p36, %p37
      %p39 = scmp.ne.s32.totalorder %s25, %s26
      %p40 = scmp.eq.s32.totalorder %s18, 1
      %p41 = por %p39, %p40
      %p43 = scmp.ne.s32.totalorder %s26, %s42
      %p44 = scmp.eq.s32.totalorder %s18, 0
      %p45 = por %p43, %p44
      %s47 = sadd.s32 %s46, 1
      %p50 = scmp.eq.s32.totalorder %s12, 1
      %p51 = scmp.ne.s32.totalorder %s46, %s48
      %p52 = scmp.eq.s32.totalorder %s12, 0
      %p53 = por %p51, %p52
      %p54 = scmp.ne.s32.totalorder %s46, %s48
      %p55 = scmp.eq.s32.totalorder %s17, 1
      %p56 = por %p54, %p55
      %p57 = scmp.ne.s32.totalorder %s48, %s49
      %p58 = scmp.eq.s32.totalorder %s17, 0
      %p59 = por %p57, %p58
      %p60 = scmp.ne.s32.totalorder %s48, %s49
      %p61 = scmp.eq.s32.totalorder %s18, 1
      %p62 = por %p60, %p61
      %p64 = scmp.ne.s32.totalorder %s49, %s63
      %p65 = scmp.eq.s32.totalorder %s18, 0
      %p66 = por %p64, %p65
      %s67 = ssub.s32 %s12, %s19
      %p68 = scmp.eq.s32.totalorder %s67, 0
      %s70 = sadd.s32 %s69, 1
      %s71 = scalar_select %p68, %s69, %s70
      %p74 = pneg %p68
      %p75 = scmp.eq.s32.totalorder %s12, 1
      %p76 = por %p74, %p75
      %p77 = scmp.ne.s32.totalorder %s69, %s72
      %p78 = scmp.eq.s32.totalorder %s12, 0
      %p79 = por %p77, %p78
      %p80 = scmp.ne.s32.totalorder %s69, %s72
      %p81 = scmp.eq.s32.totalorder %s17, 1
      %p82 = por %p80, %p81
      %p83 = scmp.ne.s32.totalorder %s72, %s73
      %p84 = scmp.eq.s32.totalorder %s17, 0
      %p85 = por %p83, %p84
      %p86 = scmp.ne.s32.totalorder %s72, %s73
      %p87 = scmp.eq.s32.totalorder %s18, 1
      %p88 = por %p86, %p87
      %p90 = scmp.ne.s32.totalorder %s73, %s89
      %p91 = scmp.eq.s32.totalorder %s18, 0
      %p92 = por %p90, %p91
      %p93 = scmp.le.s32.totalorder 1, %s12
      %p94 = scmp.lt.s32.totalorder %s12, 3
      %p95 = pnand %p93, %p94
      %p96 = pneg %p95
      // Predicated region
      $region9: #{tpu_custom_call.1} parent=5 // pred_check
        _
      $region10: #{tpu_custom_call.1} parent=5 // pred_check_branch
        %98 = sbr.rel (%p95) target = $region12
      $region11: #{tpu_custom_call.1} parent=5 // pred_region
        %s99 = ssub.s32 %s12, 1
        // Predicated region
        $region13: #{tpu_custom_call.1} parent=11 // pred_check
          %p100 = pneg %p59
        $region14: #{tpu_custom_call.1} parent=11 // pred_check_branch
          %102 = sbr.rel (%p100) target = $region16
        $region15: #{tpu_custom_call.1} parent=11 // pred_region
          %104 = vsyncadd [#allocation3], 0
          %s105 = sshll.u32 %s1, 4
          %s106 = int_to_ptr.hbm [resolvable:$true] %s105
          %s107 = sshll.u32 [#allocation2], 4
          %s108 = int_to_ptr.vmem [resolvable:$true] %s107
          %113 = dma.hbm_to_vmem [thread:$0]  %s106, 10240, %s108, [#allocation3], 2048, 2048, 128
        $region16: #{tpu_custom_call.1} parent=11 // pred_fallthru
          _
      $region12: #{tpu_custom_call.1} parent=5 // pred_fallthru
        _
      %p114 = scmp.lt.s32.totalorder %s12, 2
      // Predicated region
      $region17: #{tpu_custom_call.1} parent=5 // pred_check
        %p115 = pneg %p114
      $region18: #{tpu_custom_call.1} parent=5 // pred_check_branch
        %117 = sbr.rel (%p115) target = $region20
      $region19: #{tpu_custom_call.1} parent=5 // pred_region
        // Predicated region
        $region21: #{tpu_custom_call.1} parent=19 // pred_check
          %p118 = pneg %p32
        $region22: #{tpu_custom_call.1} parent=19 // pred_check_branch
          %120 = sbr.rel (%p118) target = $region24
        $region23: #{tpu_custom_call.1} parent=19 // pred_region
          %p121 = scmp.lt.s32.totalorder %s12, 1
          %s122 = scalar_select %p121, %s12, 1
          %s123 = smul.addr %s122, 8
          %s124 = scalar_lea.vmem %s0, %s123
        $region24: #{tpu_custom_call.1} parent=19 // pred_fallthru
          _
      $region20: #{tpu_custom_call.1} parent=5 // pred_fallthru
        _
      %p125 = scmp.le.s32.totalorder 1, %s12
      %p126 = scmp.lt.s32.totalorder %s12, 3
      %p127 = pnand %p125, %p126
      %p128 = pneg %p127
      // Predicated region
      $region25: #{tpu_custom_call.1} parent=5 // pred_check
        _
      $region26: #{tpu_custom_call.1} parent=5 // pred_check_branch
        %130 = sbr.rel (%p127) target = $region28
      $region27: #{tpu_custom_call.1} parent=5 // pred_region
        %s131 = ssub.s32 %s12, 1
        // Predicated region
        $region29: #{tpu_custom_call.1} parent=27 // pred_check
          %p132 = pneg %p59
        $region30: #{tpu_custom_call.1} parent=27 // pred_check_branch
          %134 = sbr.rel (%p132) target = $region32
        $region31: #{tpu_custom_call.1} parent=27 // pred_region
          %136 = dma.done [#allocation3], 10240
        $region32: #{tpu_custom_call.1} parent=27 // pred_fallthru
          _
        %p137 = scmp.lt.s32.totalorder %s17, 1
        %s138 = scalar_select %p137, %s17, 1
        %s139 = smul.addr %s138, 8
        %s140 = scalar_lea.vmem %s0, %s139
        %p141 = pneg %p38
        %p142 = pneg %p35
        %p143 = pneg %p59
        %p144 = pneg %p56
        %p145 = pneg %p85
        %p146 = pneg %p82
        %s147 = sand.u32 %s72, 1
        %s148 = scalar_lea.sflag [#allocation4], %s147
        %s149 = sand.u32 %s72, 1
        %s150 = smul.addr %s149, 128
        %s151 = scalar_lea.vmem [#allocation5], %s150
        %p152 = scmp.lt.s32.totalorder %s17, 1
        %s153 = scalar_select %p152, %s17, 1
        %s154 = smul.addr %s153, 8
        %s155 = scalar_lea.vmem %s0, %s154
        %v156 = vld [vmem:[%s155] sm:$0xff]
        %vm157 = vcmp.gt.s32.totalorder %v156, 0
        %v158 = vsel %vm157, %v156, 0
        %vm159 = vcmp.lt.s32.totalorder %v158, 37
        %v160 = vsel %vm159, %v158, 37
        %v161 = vlaneseq
        %v162 = vand.u32 %v161, 127
        %163 = vset.pattern.permute.xlu0 0
        %164 = vperm.xlu0 %163, %v160
        %v165 = vpop.permute.xlu0 %164
        %vm166 = vcmp.eq.s32.totalorder %v165, %v162
        %v167 = vsel %vm166, 1, 0
        %v168 = vcvt.s32.f32 %v167
        %v169 = vld [vmem:[#allocation2] sm:$0xff]
        %v170 = vld [vmem:[#allocation2 + $0x8] sm:$0xff]
        %v171 = vld [vmem:[#allocation2 + $0x10] sm:$0xff]
        %v172 = vld [vmem:[#allocation2 + $0x18] sm:$0xff]
        %v173 = vld [vmem:[#allocation2 + $0x20] sm:$0xff]
        %v174 = vld [vmem:[#allocation2 + $0x28] sm:$0xff]
        %v175 = vld [vmem:[#allocation2 + $0x30] sm:$0xff]
        %v176 = vld [vmem:[#allocation2 + $0x38] sm:$0xff]
        %v177 = vld [vmem:[#allocation2 + $0x40] sm:$0xff]
        %v178 = vld [vmem:[#allocation2 + $0x48] sm:$0xff]
        %v179 = vld [vmem:[#allocation2 + $0x50] sm:$0xff]
        %v180 = vld [vmem:[#allocation2 + $0x58] sm:$0xff]
        %v181 = vld [vmem:[#allocation2 + $0x60] sm:$0xff]
        %v182 = vld [vmem:[#allocation2 + $0x68] sm:$0xff]
        %v183 = vld [vmem:[#allocation2 + $0x70] sm:$0xff]
        %v184 = vld [vmem:[#allocation2 + $0x78] sm:$0xff]
        %v185 = vld [vmem:[#allocation2 + $0x80] sm:$0xff]
        %v186 = vld [vmem:[#allocation2 + $0x88] sm:$0xff]
        %v187 = vld [vmem:[#allocation2 + $0x90] sm:$0xff]
        %v188 = vld [vmem:[#allocation2 + $0x98] sm:$0xff]
        %v189 = vld [vmem:[#allocation2 + $0xa0] sm:$0xff]
        %v190 = vld [vmem:[#allocation2 + $0xa8] sm:$0xff]
        %v191 = vld [vmem:[#allocation2 + $0xb0] sm:$0xff]
        %v192 = vld [vmem:[#allocation2 + $0xb8] sm:$0xff]
        %v193 = vld [vmem:[#allocation2 + $0xc0] sm:$0xff]
        %v194 = vld [vmem:[#allocation2 + $0xc8] sm:$0xff]
        %v195 = vld [vmem:[#allocation2 + $0xd0] sm:$0xff]
        %v196 = vld [vmem:[#allocation2 + $0xd8] sm:$0xff]
        %v197 = vld [vmem:[#allocation2 + $0xe0] sm:$0xff]
        %v198 = vld [vmem:[#allocation2 + $0xe8] sm:$0xff]
        %v199 = vld [vmem:[#allocation2 + $0xf0] sm:$0xff]
        %v200 = vld [vmem:[#allocation2 + $0xf8] sm:$0xff]
        %v201 = vld [vmem:[#allocation2 + $0x100] sm:$0xff]
        %v202 = vld [vmem:[#allocation2 + $0x108] sm:$0xff]
        %v203 = vld [vmem:[#allocation2 + $0x110] sm:$0xff]
        %v204 = vld [vmem:[#allocation2 + $0x118] sm:$0xff]
        %v205 = vld [vmem:[#allocation2 + $0x120] sm:$0xff]
        %v206 = vld [vmem:[#allocation2 + $0x128] sm:$0xff]
        %v207 = vld [vmem:[#allocation2 + $0x130] sm:$0xff]
        %v208 = vld [vmem:[#allocation2 + $0x138] sm:$0xff]
        %v209 = vld [vmem:[#allocation2 + $0x140] sm:$0xff]
        %v210 = vld [vmem:[#allocation2 + $0x148] sm:$0xff]
        %v211 = vld [vmem:[#allocation2 + $0x150] sm:$0xff]
        %v212 = vld [vmem:[#allocation2 + $0x158] sm:$0xff]
        %v213 = vld [vmem:[#allocation2 + $0x160] sm:$0xff]
        %v214 = vld [vmem:[#allocation2 + $0x168] sm:$0xff]
        %v215 = vld [vmem:[#allocation2 + $0x170] sm:$0xff]
        %v216 = vld [vmem:[#allocation2 + $0x178] sm:$0xff]
        %v217 = vld [vmem:[#allocation2 + $0x180] sm:$0xff]
        %v218 = vld [vmem:[#allocation2 + $0x188] sm:$0xff]
        %v219 = vld [vmem:[#allocation2 + $0x190] sm:$0xff]
        %v220 = vld [vmem:[#allocation2 + $0x198] sm:$0xff]
        %v221 = vld [vmem:[#allocation2 + $0x1a0] sm:$0xff]
        %v222 = vld [vmem:[#allocation2 + $0x1a8] sm:$0xff]
        %v223 = vld [vmem:[#allocation2 + $0x1b0] sm:$0xff]
        %v224 = vld [vmem:[#allocation2 + $0x1b8] sm:$0xff]
        %v225 = vld [vmem:[#allocation2 + $0x1c0] sm:$0xff]
        %v226 = vld [vmem:[#allocation2 + $0x1c8] sm:$0xff]
        %v227 = vld [vmem:[#allocation2 + $0x1d0] sm:$0xff]
        %v228 = vld [vmem:[#allocation2 + $0x1d8] sm:$0xff]
        %v229 = vld [vmem:[#allocation2 + $0x1e0] sm:$0xff]
        %v230 = vld [vmem:[#allocation2 + $0x1e8] sm:$0xff]
        %v231 = vld [vmem:[#allocation2 + $0x1f0] sm:$0xff]
        %v232 = vld [vmem:[#allocation2 + $0x1f8] sm:$0xff]
        %v233 = vld [vmem:[#allocation2 + $0x200] sm:$0x3f]
        %v234 = vld [vmem:[#allocation2 + $0x208] sm:$0x3f]
        %v235 = vld [vmem:[#allocation2 + $0x210] sm:$0x3f]
        %v236 = vld [vmem:[#allocation2 + $0x218] sm:$0x3f]
        %v237 = vld [vmem:[#allocation2 + $0x220] sm:$0x3f]
        %v238 = vld [vmem:[#allocation2 + $0x228] sm:$0x3f]
        %v239 = vld [vmem:[#allocation2 + $0x230] sm:$0x3f]
        %v240 = vld [vmem:[#allocation2 + $0x238] sm:$0x3f]
        %v241 = vld [vmem:[#allocation2 + $0x240] sm:$0x3f]
        %v242 = vld [vmem:[#allocation2 + $0x248] sm:$0x3f]
        %v243 = vld [vmem:[#allocation2 + $0x250] sm:$0x3f]
        %v244 = vld [vmem:[#allocation2 + $0x258] sm:$0x3f]
        %v245 = vld [vmem:[#allocation2 + $0x260] sm:$0x3f]
        %v246 = vld [vmem:[#allocation2 + $0x268] sm:$0x3f]
        %v247 = vld [vmem:[#allocation2 + $0x270] sm:$0x3f]
        %v248 = vld [vmem:[#allocation2 + $0x278] sm:$0x3f]
        %vm249 = vcmask 310272
        %v251 = vsel %vm249, %v168, 0
        %vm253 = vcmask 1045504
        %v255 = vsel %vm253, %v233, 0
        %v258 = vsel %vm253, %v234, 0
        %v261 = vsel %vm253, %v235, 0
        %v264 = vsel %vm253, %v236, 0
        %v267 = vsel %vm253, %v237, 0
        %v270 = vsel %vm253, %v238, 0
        %v273 = vsel %vm253, %v239, 0
        %v276 = vsel %vm253, %v240, 0
        %v279 = vsel %vm253, %v241, 0
        %v282 = vsel %vm253, %v242, 0
        %v285 = vsel %vm253, %v243, 0
        %v288 = vsel %vm253, %v244, 0
        %v291 = vsel %vm253, %v245, 0
        %v294 = vsel %vm253, %v246, 0
        %v297 = vsel %vm253, %v247, 0
        %v300 = vsel %vm253, %v248, 0
        %302 = vmatpush.msra.mxu0 0.0
        %303 = vmatpush.msra.mxu0 0.0
        %304 = vmatpush.msra.mxu0 0.0
        %305 = vmatpush.msra.mxu0 0.0
        %306 = vmatpush.msra.mxu0 0.0
        %307 = vmatpush.msra.mxu0 0.0
        %308 = vmatpush.msra.mxu0 0.0
        %309 = vmatpush.msra.mxu0 0.0
        %310 = vmatpush.msra.mxu0 0.0
        %311 = vmatpush.msra.mxu0 0.0
        %312 = vmatpush.msra.mxu0 0.0
        %313 = vmatpush.msra.mxu0 %v255
        %314 = vmatpush.msra.mxu0 %v217
        %315 = vmatpush.msra.mxu0 %v201
        %316 = vmatpush.msra.mxu0 %v185
        %317 = vmatpush.msra.mxu0 %v169
        %318 = vmatmul.f32.gmra.mxu0 %v251
        %v319 = vpop.f32.mrf.mxu0
        %v320 = vadd.f32 0.0, %v319
        %321 = vdwg.mxu0
        %322 = vmatpush.msra.mxu0 0.0
        %323 = vmatpush.msra.mxu0 0.0
        %324 = vmatpush.msra.mxu0 0.0
        %325 = vmatpush.msra.mxu0 0.0
        %326 = vmatpush.msra.mxu0 0.0
        %327 = vmatpush.msra.mxu0 0.0
        %328 = vmatpush.msra.mxu0 0.0
        %329 = vmatpush.msra.mxu0 0.0
        %330 = vmatpush.msra.mxu0 0.0
        %331 = vmatpush.msra.mxu0 0.0
        %332 = vmatpush.msra.mxu0 0.0
        %333 = vmatpush.msra.mxu0 %v258
        %334 = vmatpush.msra.mxu0 %v218
        %335 = vmatpush.msra.mxu0 %v202
        %336 = vmatpush.msra.mxu0 %v186
        %337 = vmatpush.msra.mxu0 %v170
        %338 = vmatmul.f32.gmra.mxu0 %v251
        %v339 = vpop.f32.mrf.mxu0
        %v340 = vadd.f32 0.0, %v339
        %341 = vdwg.mxu0
        %342 = vmatpush.msra.mxu0 0.0
        %343 = vmatpush.msra.mxu0 0.0
        %344 = vmatpush.msra.mxu0 0.0
        %345 = vmatpush.msra.mxu0 0.0
        %346 = vmatpush.msra.mxu0 0.0
        %347 = vmatpush.msra.mxu0 0.0
        %348 = vmatpush.msra.mxu0 0.0
        %349 = vmatpush.msra.mxu0 0.0
        %350 = vmatpush.msra.mxu0 0.0
        %351 = vmatpush.msra.mxu0 0.0
        %352 = vmatpush.msra.mxu0 0.0
        %353 = vmatpush.msra.mxu0 %v261
        %354 = vmatpush.msra.mxu0 %v219
        %355 = vmatpush.msra.mxu0 %v203
        %356 = vmatpush.msra.mxu0 %v187
        %357 = vmatpush.msra.mxu0 %v171
        %358 = vmatmul.f32.gmra.mxu0 %v251
        %v359 = vpop.f32.mrf.mxu0
        %v360 = vadd.f32 0.0, %v359
        %361 = vdwg.mxu0
        %362 = vmatpush.msra.mxu0 0.0
        %363 = vmatpush.msra.mxu0 0.0
        %364 = vmatpush.msra.mxu0 0.0
        %365 = vmatpush.msra.mxu0 0.0
        %366 = vmatpush.msra.mxu0 0.0
        %367 = vmatpush.msra.mxu0 0.0
        %368 = vmatpush.msra.mxu0 0.0
        %369 = vmatpush.msra.mxu0 0.0
        %370 = vmatpush.msra.mxu0 0.0
        %371 = vmatpush.msra.mxu0 0.0
        %372 = vmatpush.msra.mxu0 0.0
        %373 = vmatpush.msra.mxu0 %v264
        %374 = vmatpush.msra.mxu0 %v220
        %375 = vmatpush.msra.mxu0 %v204
        %376 = vmatpush.msra.mxu0 %v188
        %377 = vmatpush.msra.mxu0 %v172
        %378 = vmatmul.f32.gmra.mxu0 %v251
        %v379 = vpop.f32.mrf.mxu0
        %v380 = vadd.f32 0.0, %v379
        %381 = vdwg.mxu0
        %382 = vmatpush.msra.mxu0 0.0
        %383 = vmatpush.msra.mxu0 0.0
        %384 = vmatpush.msra.mxu0 0.0
        %385 = vmatpush.msra.mxu0 0.0
        %386 = vmatpush.msra.mxu0 0.0
        %387 = vmatpush.msra.mxu0 0.0
        %388 = vmatpush.msra.mxu0 0.0
        %389 = vmatpush.msra.mxu0 0.0
        %390 = vmatpush.msra.mxu0 0.0
        %391 = vmatpush.msra.mxu0 0.0
        %392 = vmatpush.msra.mxu0 0.0
        %393 = vmatpush.msra.mxu0 %v267
        %394 = vmatpush.msra.mxu0 %v221
        %395 = vmatpush.msra.mxu0 %v205
        %396 = vmatpush.msra.mxu0 %v189
        %397 = vmatpush.msra.mxu0 %v173
        %398 = vmatmul.f32.gmra.mxu0 %v251
        %v399 = vpop.f32.mrf.mxu0
        %v400 = vadd.f32 0.0, %v399
        %401 = vdwg.mxu0
        %402 = vmatpush.msra.mxu0 0.0
        %403 = vmatpush.msra.mxu0 0.0
        %404 = vmatpush.msra.mxu0 0.0
        %405 = vmatpush.msra.mxu0 0.0
        %406 = vmatpush.msra.mxu0 0.0
        %407 = vmatpush.msra.mxu0 0.0
        %408 = vmatpush.msra.mxu0 0.0
        %409 = vmatpush.msra.mxu0 0.0
        %410 = vmatpush.msra.mxu0 0.0
        %411 = vmatpush.msra.mxu0 0.0
        %412 = vmatpush.msra.mxu0 0.0
        %413 = vmatpush.msra.mxu0 %v270
        %414 = vmatpush.msra.mxu0 %v222
        %415 = vmatpush.msra.mxu0 %v206
        %416 = vmatpush.msra.mxu0 %v190
        %417 = vmatpush.msra.mxu0 %v174
        %418 = vmatmul.f32.gmra.mxu0 %v251
        %v419 = vpop.f32.mrf.mxu0
        %v420 = vadd.f32 0.0, %v419
        %421 = vdwg.mxu0
        %422 = vmatpush.msra.mxu0 0.0
        %423 = vmatpush.msra.mxu0 0.0
        %424 = vmatpush.msra.mxu0 0.0
        %425 = vmatpush.msra.mxu0 0.0
        %426 = vmatpush.msra.mxu0 0.0
        %427 = vmatpush.msra.mxu0 0.0
        %428 = vmatpush.msra.mxu0 0.0
        %429 = vmatpush.msra.mxu0 0.0
        %430 = vmatpush.msra.mxu0 0.0
        %431 = vmatpush.msra.mxu0 0.0
        %432 = vmatpush.msra.mxu0 0.0
        %433 = vmatpush.msra.mxu0 %v273
        %434 = vmatpush.msra.mxu0 %v223
        %435 = vmatpush.msra.mxu0 %v207
        %436 = vmatpush.msra.mxu0 %v191
        %437 = vmatpush.msra.mxu0 %v175
        %438 = vmatmul.f32.gmra.mxu0 %v251
        %v439 = vpop.f32.mrf.mxu0
        %v440 = vadd.f32 0.0, %v439
        %441 = vdwg.mxu0
        %442 = vmatpush.msra.mxu0 0.0
        %443 = vmatpush.msra.mxu0 0.0
        %444 = vmatpush.msra.mxu0 0.0
        %445 = vmatpush.msra.mxu0 0.0
        %446 = vmatpush.msra.mxu0 0.0
        %447 = vmatpush.msra.mxu0 0.0
        %448 = vmatpush.msra.mxu0 0.0
        %449 = vmatpush.msra.mxu0 0.0
        %450 = vmatpush.msra.mxu0 0.0
        %451 = vmatpush.msra.mxu0 0.0
        %452 = vmatpush.msra.mxu0 0.0
        %453 = vmatpush.msra.mxu0 %v276
        %454 = vmatpush.msra.mxu0 %v224
        %455 = vmatpush.msra.mxu0 %v208
        %456 = vmatpush.msra.mxu0 %v192
        %457 = vmatpush.msra.mxu0 %v176
        %458 = vmatmul.f32.gmra.mxu0 %v251
        %v459 = vpop.f32.mrf.mxu0
        %v460 = vadd.f32 0.0, %v459
        %461 = vdwg.mxu0
        %462 = vmatpush.msra.mxu0 0.0
        %463 = vmatpush.msra.mxu0 0.0
        %464 = vmatpush.msra.mxu0 0.0
        %465 = vmatpush.msra.mxu0 0.0
        %466 = vmatpush.msra.mxu0 0.0
        %467 = vmatpush.msra.mxu0 0.0
        %468 = vmatpush.msra.mxu0 0.0
        %469 = vmatpush.msra.mxu0 0.0
        %470 = vmatpush.msra.mxu0 0.0
        %471 = vmatpush.msra.mxu0 0.0
        %472 = vmatpush.msra.mxu0 0.0
        %473 = vmatpush.msra.mxu0 %v279
        %474 = vmatpush.msra.mxu0 %v225
        %475 = vmatpush.msra.mxu0 %v209
        %476 = vmatpush.msra.mxu0 %v193
        %477 = vmatpush.msra.mxu0 %v177
        %478 = vmatmul.f32.gmra.mxu0 %v251
        %v479 = vpop.f32.mrf.mxu0
        %v480 = vadd.f32 0.0, %v479
        %481 = vdwg.mxu0
        %482 = vmatpush.msra.mxu0 0.0
        %483 = vmatpush.msra.mxu0 0.0
        %484 = vmatpush.msra.mxu0 0.0
        %485 = vmatpush.msra.mxu0 0.0
        %486 = vmatpush.msra.mxu0 0.0
        %487 = vmatpush.msra.mxu0 0.0
        %488 = vmatpush.msra.mxu0 0.0
        %489 = vmatpush.msra.mxu0 0.0
        %490 = vmatpush.msra.mxu0 0.0
        %491 = vmatpush.msra.mxu0 0.0
        %492 = vmatpush.msra.mxu0 0.0
        %493 = vmatpush.msra.mxu0 %v282
        %494 = vmatpush.msra.mxu0 %v226
        %495 = vmatpush.msra.mxu0 %v210
        %496 = vmatpush.msra.mxu0 %v194
        %497 = vmatpush.msra.mxu0 %v178
        %498 = vmatmul.f32.gmra.mxu0 %v251
        %v499 = vpop.f32.mrf.mxu0
        %v500 = vadd.f32 0.0, %v499
        %501 = vdwg.mxu0
        %502 = vmatpush.msra.mxu0 0.0
        %503 = vmatpush.msra.mxu0 0.0
        %504 = vmatpush.msra.mxu0 0.0
        %505 = vmatpush.msra.mxu0 0.0
        %506 = vmatpush.msra.mxu0 0.0
        %507 = vmatpush.msra.mxu0 0.0
        %508 = vmatpush.msra.mxu0 0.0
        %509 = vmatpush.msra.mxu0 0.0
        %510 = vmatpush.msra.mxu0 0.0
        %511 = vmatpush.msra.mxu0 0.0
        %512 = vmatpush.msra.mxu0 0.0
        %513 = vmatpush.msra.mxu0 %v285
        %514 = vmatpush.msra.mxu0 %v227
        %515 = vmatpush.msra.mxu0 %v211
        %516 = vmatpush.msra.mxu0 %v195
        %517 = vmatpush.msra.mxu0 %v179
        %518 = vmatmul.f32.gmra.mxu0 %v251
        %v519 = vpop.f32.mrf.mxu0
        %v520 = vadd.f32 0.0, %v519
        %521 = vdwg.mxu0
        %522 = vmatpush.msra.mxu0 0.0
        %523 = vmatpush.msra.mxu0 0.0
        %524 = vmatpush.msra.mxu0 0.0
        %525 = vmatpush.msra.mxu0 0.0
        %526 = vmatpush.msra.mxu0 0.0
        %527 = vmatpush.msra.mxu0 0.0
        %528 = vmatpush.msra.mxu0 0.0
        %529 = vmatpush.msra.mxu0 0.0
        %530 = vmatpush.msra.mxu0 0.0
        %531 = vmatpush.msra.mxu0 0.0
        %532 = vmatpush.msra.mxu0 0.0
        %533 = vmatpush.msra.mxu0 %v288
        %534 = vmatpush.msra.mxu0 %v228
        %535 = vmatpush.msra.mxu0 %v212
        %536 = vmatpush.msra.mxu0 %v196
        %537 = vmatpush.msra.mxu0 %v180
        %538 = vmatmul.f32.gmra.mxu0 %v251
        %v539 = vpop.f32.mrf.mxu0
        %v540 = vadd.f32 0.0, %v539
        %541 = vdwg.mxu0
        %542 = vmatpush.msra.mxu0 0.0
        %543 = vmatpush.msra.mxu0 0.0
        %544 = vmatpush.msra.mxu0 0.0
        %545 = vmatpush.msra.mxu0 0.0
        %546 = vmatpush.msra.mxu0 0.0
        %547 = vmatpush.msra.mxu0 0.0
        %548 = vmatpush.msra.mxu0 0.0
        %549 = vmatpush.msra.mxu0 0.0
        %550 = vmatpush.msra.mxu0 0.0
        %551 = vmatpush.msra.mxu0 0.0
        %552 = vmatpush.msra.mxu0 0.0
        %553 = vmatpush.msra.mxu0 %v291
        %554 = vmatpush.msra.mxu0 %v229
        %555 = vmatpush.msra.mxu0 %v213
        %556 = vmatpush.msra.mxu0 %v197
        %557 = vmatpush.msra.mxu0 %v181
        %558 = vmatmul.f32.gmra.mxu0 %v251
        %v559 = vpop.f32.mrf.mxu0
        %v560 = vadd.f32 0.0, %v559
        %561 = vdwg.mxu0
        %562 = vmatpush.msra.mxu0 0.0
        %563 = vmatpush.msra.mxu0 0.0
        %564 = vmatpush.msra.mxu0 0.0
        %565 = vmatpush.msra.mxu0 0.0
        %566 = vmatpush.msra.mxu0 0.0
        %567 = vmatpush.msra.mxu0 0.0
        %568 = vmatpush.msra.mxu0 0.0
        %569 = vmatpush.msra.mxu0 0.0
        %570 = vmatpush.msra.mxu0 0.0
        %571 = vmatpush.msra.mxu0 0.0
        %572 = vmatpush.msra.mxu0 0.0
        %573 = vmatpush.msra.mxu0 %v294
        %574 = vmatpush.msra.mxu0 %v230
        %575 = vmatpush.msra.mxu0 %v214
        %576 = vmatpush.msra.mxu0 %v198
        %577 = vmatpush.msra.mxu0 %v182
        %578 = vmatmul.f32.gmra.mxu0 %v251
        %v579 = vpop.f32.mrf.mxu0
        %v580 = vadd.f32 0.0, %v579
        %581 = vdwg.mxu0
        %582 = vmatpush.msra.mxu0 0.0
        %583 = vmatpush.msra.mxu0 0.0
        %584 = vmatpush.msra.mxu0 0.0
        %585 = vmatpush.msra.mxu0 0.0
        %586 = vmatpush.msra.mxu0 0.0
        %587 = vmatpush.msra.mxu0 0.0
        %588 = vmatpush.msra.mxu0 0.0
        %589 = vmatpush.msra.mxu0 0.0
        %590 = vmatpush.msra.mxu0 0.0
        %591 = vmatpush.msra.mxu0 0.0
        %592 = vmatpush.msra.mxu0 0.0
        %593 = vmatpush.msra.mxu0 %v297
        %594 = vmatpush.msra.mxu0 %v231
        %595 = vmatpush.msra.mxu0 %v215
        %596 = vmatpush.msra.mxu0 %v199
        %597 = vmatpush.msra.mxu0 %v183
        %598 = vmatmul.f32.gmra.mxu0 %v251
        %v599 = vpop.f32.mrf.mxu0
        %v600 = vadd.f32 0.0, %v599
        %601 = vdwg.mxu0
        %602 = vmatpush.msra.mxu0 0.0
        %603 = vmatpush.msra.mxu0 0.0
        %604 = vmatpush.msra.mxu0 0.0
        %605 = vmatpush.msra.mxu0 0.0
        %606 = vmatpush.msra.mxu0 0.0
        %607 = vmatpush.msra.mxu0 0.0
        %608 = vmatpush.msra.mxu0 0.0
        %609 = vmatpush.msra.mxu0 0.0
        %610 = vmatpush.msra.mxu0 0.0
        %611 = vmatpush.msra.mxu0 0.0
        %612 = vmatpush.msra.mxu0 0.0
        %613 = vmatpush.msra.mxu0 %v300
        %614 = vmatpush.msra.mxu0 %v232
        %615 = vmatpush.msra.mxu0 %v216
        %616 = vmatpush.msra.mxu0 %v200
        %617 = vmatpush.msra.mxu0 %v184
        %618 = vmatmul.f32.gmra.mxu0 %v251
        %v619 = vpop.f32.mrf.mxu0
        %v620 = vadd.f32 0.0, %v619
        %621 = vdwg.mxu0
        %622 = vst [vmem:[%s151] sm:$0xff] %v320
        %623 = vst [vmem:[%s151 + $0x8] sm:$0xff] %v340
        %624 = vst [vmem:[%s151 + $0x10] sm:$0xff] %v360
        %625 = vst [vmem:[%s151 + $0x18] sm:$0xff] %v380
        %626 = vst [vmem:[%s151 + $0x20] sm:$0xff] %v400
        %627 = vst [vmem:[%s151 + $0x28] sm:$0xff] %v420
        %628 = vst [vmem:[%s151 + $0x30] sm:$0xff] %v440
        %629 = vst [vmem:[%s151 + $0x38] sm:$0xff] %v460
        %630 = vst [vmem:[%s151 + $0x40] sm:$0xff] %v480
        %631 = vst [vmem:[%s151 + $0x48] sm:$0xff] %v500
        %632 = vst [vmem:[%s151 + $0x50] sm:$0xff] %v520
        %633 = vst [vmem:[%s151 + $0x58] sm:$0xff] %v540
        %634 = vst [vmem:[%s151 + $0x60] sm:$0xff] %v560
        %635 = vst [vmem:[%s151 + $0x68] sm:$0xff] %v580
        %636 = vst [vmem:[%s151 + $0x70] sm:$0xff] %v600
        %637 = vst [vmem:[%s151 + $0x78] sm:$0xff] %v620
        %s638 = sand.u32 %s72, 1
        %s639 = scalar_lea.sflag [#allocation4], %s638
        %s640 = sand.u32 %s72, 1
        %s641 = smul.addr %s640, 128
        %s642 = scalar_lea.vmem [#allocation5], %s641
        // Predicated region
        $region33: #{tpu_custom_call.1} parent=27 // pred_check
          %p643 = pneg %p82
        $region34: #{tpu_custom_call.1} parent=27 // pred_check_branch
          %645 = sbr.rel (%p643) target = $region36
        $region35: #{tpu_custom_call.1} parent=27 // pred_region
          %647 = vsyncadd %s639, 0
          %s648 = smul.addr %s17, 16
          %s649 = smul.addr %s648, 8
          %s650 = scalar_lea.hbm %s2, %s649
          %s652 = sshll.u32 %s642, 4
          %s653 = int_to_ptr.vmem [resolvable:$true] %s652
          %s654 = sshll.u32 %s650, 4
          %s655 = int_to_ptr.hbm [resolvable:$true] %s654
          %657 = dma.vmem_to_hbm [thread:$0]  %s653, 2048, %s655, %s639
        $region36: #{tpu_custom_call.1} parent=27 // pred_fallthru
          _
      $region28: #{tpu_custom_call.1} parent=5 // pred_fallthru
        _
      %p658 = scmp.le.s32.totalorder 2, %s12
      // Predicated region
      $region37: #{tpu_custom_call.1} parent=5 // pred_check
        %p659 = pneg %p658
      $region38: #{tpu_custom_call.1} parent=5 // pred_check_branch
        %661 = sbr.rel (%p659) target = $region40
      $region39: #{tpu_custom_call.1} parent=5 // pred_region
        %s662 = ssub.s32 %s12, 2
        // Predicated region
        $region41: #{tpu_custom_call.1} parent=39 // pred_check
          %p663 = pneg %p88
        $region42: #{tpu_custom_call.1} parent=39 // pred_check_branch
          %665 = sbr.rel (%p663) target = $region44
        $region43: #{tpu_custom_call.1} parent=39 // pred_region
          %s666 = sand.u32 %s73, 1
          %s667 = scalar_lea.sflag [#allocation4], %s666
          %s668 = sand.u32 %s73, 1
          %s669 = smul.addr %s668, 128
          %s670 = scalar_lea.vmem [#allocation5], %s669
          %672 = dma.done %s667, 2048
        $region44: #{tpu_custom_call.1} parent=39 // pred_fallthru
          _
      $region40: #{tpu_custom_call.1} parent=5 // pred_fallthru
        _
    $region6: #{tpu_custom_call.1} parent=1 // loop_footer
      %s16 = sadd.s32 1, %s12
    $region7: #{tpu_custom_call.1} parent=1 // loop_footer_branch
      %11 = sbr.rel target = $region3
    $region8: #{tpu_custom_call.1} parent=1 // loop_exit
      _
    %673 = vsyncpa [#allocation3], 1
    %s674 = scalar_lea.sflag [#allocation3], 1
    %675 = vsyncpa %s674, 1
    %676 = vsyncpa [#allocation4], 1
    %s677 = scalar_lea.sflag [#allocation4], 1
    %678 = vsyncpa %s677, 1

</llo_original>
